<compile_context>
chip_gen: v7x
topology: tpu7x:2x2x1
jax: 0.10.0
libtpu: 0.0.40
codegen_flags: <defaults>
</compile_context>

<pallas_src>
import functools

import jax
import jax.numpy as jnp
from jax.experimental import pallas as pl
from jax.experimental.pallas import tpu as pltpu

IN_DIM = 28 * 28   # 784
HID_DIM = 20


def autoencoder_kernel(x_ref, w1_ref, b1_ref, w2_ref, b2_ref, o_ref):
    """Full forward pass for one batch tile.

    x_ref  : (TB, 784)  input tile (f32 or bf16)
    w1_ref : (784, 20)  encoder weight, bf16, (in, out) layout
    b1_ref : (1, 20)    encoder bias, f32
    w2_ref : (20, 784)  decoder weight, bf16, (in, out) layout
    b2_ref : (1, 784)   decoder bias, f32
    o_ref  : (TB, 784)  output tile (f32 or bf16)
    """
    # bf16 MXU operands with f32 accumulation: single-pass MXU, half the vreg footprint.
    x = x_ref[...].astype(jnp.bfloat16)
    # Encoder: Linear(784 -> 20) + ReLU   (bias add + activation in f32)
    h = jnp.dot(x, w1_ref[...], preferred_element_type=jnp.float32) + b1_ref[...]
    h = jnp.maximum(h, 0.0)
    # Decoder: Linear(20 -> 784) + Sigmoid
    y = (jnp.dot(h.astype(jnp.bfloat16), w2_ref[...],
                 preferred_element_type=jnp.float32) + b2_ref[...])
    # sigmoid(y) == 0.5 * tanh(0.5 * y) + 0.5 : one EUP transcendental, no VALU divide.
    o_ref[...] = (0.5 * jnp.tanh(0.5 * y) + 0.5).astype(o_ref.dtype)


def _physical_vmem_bytes():
    """Per-core physical VMEM; conservative (v7x-sized) fallback if the query fails."""
    try:
        return int(pltpu.get_tpu_info().vmem_capacity_bytes)
    except Exception:
        return 64 << 20


@functools.partial(jax.jit, static_argnames=("tile_b", "out_dtype"))
def autoencoder_forward(x, w1, b1, w2, b2, *, tile_b=2048, out_dtype=None):
    B, D = x.shape
    assert D == IN_DIM
    out_dtype = jnp.dtype(out_dtype) if out_dtype is not None else jnp.dtype(x.dtype)

    # Weights are tiny (~62 KiB in bf16); casting them once in the wrapper is negligible
    # HBM traffic and avoids re-converting them on every grid step inside the kernel.
    w1 = w1.astype(jnp.bfloat16)
    w2 = w2.astype(jnp.bfloat16)
    b1 = b1.astype(jnp.float32)
    b2 = b2.astype(jnp.float32)

    in_row_bytes = IN_DIM * jnp.dtype(x.dtype).itemsize
    out_row_bytes = IN_DIM * out_dtype.itemsize
    weight_bytes = (IN_DIM * HID_DIM + HID_DIM * IN_DIM) * 2 + (HID_DIM + IN_DIM) * 4

    # Generation-aware VMEM budget (128 MiB on v5e/v6e, 64 MiB on v7x), with ~16 MiB
    # headroom for Mosaic-internal scratch / semaphores instead of clamping to physical.
    vmem_cap = max(_physical_vmem_bytes() - (16 << 20), 16 << 20)

    # Largest tile that fits double-buffered in+out under the cap, then clamp the request
    # to it and to the (8-aligned) batch.
    pipelined_row_bytes = 2 * (in_row_bytes + out_row_bytes)       # double-buffered in + out
    tile_budget = vmem_cap - 2 * weight_bytes - (4 << 20)
    tile_b_max = max(8, (tile_budget // pipelined_row_bytes) // 8 * 8)
    tile_b = min(int(tile_b), tile_b_max, ((B + 7) // 8) * 8)
    tile_b = max(8, (tile_b // 8) * 8)

    # Ragged last block: no wrapper-side jnp.pad (that would be a full extra HBM pass over
    # x).  Pallas bounds the last partial block's DMAs and masks its tail store; garbage
    # rows in the last tile only affect themselves and are never written back.
    grid = (pl.cdiv(B, tile_b),)

    needed = 2 * tile_b * (in_row_bytes + out_row_bytes) + 2 * weight_bytes + (4 << 20)
    vmem_limit_bytes = int(min(max(needed, 32 << 20), vmem_cap))

    cost = pl.CostEstimate(
        flops=4 * B * IN_DIM * HID_DIM + 4 * B * IN_DIM,
        transcendentals=B * IN_DIM,
        bytes_accessed=B * (in_row_bytes + out_row_bytes) + weight_bytes,
    )

    out = pl.pallas_call(
        autoencoder_kernel,
        out_shape=jax.ShapeDtypeStruct((B, IN_DIM), out_dtype),
        grid_spec=pltpu.PrefetchScalarGridSpec(
            num_scalar_prefetch=0,
            grid=grid,
            in_specs=[
                pl.BlockSpec((tile_b, IN_DIM), lambda i: (i, 0)),   # x tile
                pl.BlockSpec((IN_DIM, HID_DIM), lambda i: (0, 0)),  # W1 (grid-invariant)
                pl.BlockSpec((1, HID_DIM), lambda i: (0, 0)),       # b1 (grid-invariant)
                pl.BlockSpec((HID_DIM, IN_DIM), lambda i: (0, 0)),  # W2 (grid-invariant)
                pl.BlockSpec((1, IN_DIM), lambda i: (0, 0)),        # b2 (grid-invariant)
            ],
            out_specs=pl.BlockSpec((tile_b, IN_DIM), lambda i: (i, 0)),
        ),
        compiler_params=pltpu.CompilerParams(
            # Batch tiles are independent: "parallel" lets multi-TC parts (v7x megacore)
            # shard the 1-D grid; harmless on single-TC v5e/v6e.  If an xprof trace shows
            # only one TC active on v7x, switch to pltpu.CORE_PARALLEL.
            dimension_semantics=("parallel",),
            vmem_limit_bytes=vmem_limit_bytes,
        ),
        cost_estimate=cost,
    )(x, w1, b1, w2, b2)

    return out


def init_params(key):
    """Deterministic init mimicking PyTorch nn.Linear default (U[-1/sqrt(fan_in), 1/sqrt(fan_in)])."""
    k1, k2, k3, k4 = jax.random.split(key, 4)
    bound1 = 1.0 / jnp.sqrt(jnp.float32(IN_DIM))
    bound2 = 1.0 / jnp.sqrt(jnp.float32(HID_DIM))
    # Stored already transposed to (in, out) so the kernel does x @ W.
    w1 = jax.random.uniform(k1, (IN_DIM, HID_DIM), jnp.float32, -bound1, bound1)
    b1 = jax.random.uniform(k2, (1, HID_DIM), jnp.float32, -bound1, bound1)
    w2 = jax.random.uniform(k3, (HID_DIM, IN_DIM), jnp.float32, -bound2, bound2)
    b2 = jax.random.uniform(k4, (1, IN_DIM), jnp.float32, -bound2, bound2)
    return w1, b1, w2, b2


def reference_forward(x, w1, b1, w2, b2):
    h = jnp.maximum(x @ w1 + b1, 0.0)
    return jax.nn.sigmoid(h @ w2 + b2)


if __name__ == "__main__":
    key = jax.random.PRNGKey(0)
    kx, kp = jax.random.split(key)

    B = 24  # small, deliberately NOT a multiple of the small tile -> exercises ragged path
    x = jax.random.uniform(kx, (B, IN_DIM), jnp.float32)

    w1, b1, w2, b2 = init_params(kp)
    ref = reference_forward(x, w1, b1, w2, b2)

    # Small explicit tile -> 2-step grid with a ragged (masked) last block.
    out_small_tile = jax.block_until_ready(
        autoencoder_forward(x, w1, b1, w2, b2, tile_b=16)
    )
    # Default large-tile path (clamped down to this small batch -> single grid step).
    out_default = jax.block_until_ready(autoencoder_forward(x, w1, b1, w2, b2))
    # bf16 output path (halves the write-side HBM traffic when the consumer accepts bf16).
    out_bf16 = jax.block_until_ready(
        autoencoder_forward(x, w1, b1, w2, b2, out_dtype=jnp.bfloat16)
    )

    assert out_small_tile.shape == (B, IN_DIM)
    assert out_default.shape == (B, IN_DIM)
    assert out_bf16.shape == (B, IN_DIM) and out_bf16.dtype == jnp.bfloat16
    # bf16 MXU operands -> tolerance loosened from 1e-5 to ~2e-2 (sigmoid output in [0,1]).
    assert jnp.allclose(out_small_tile, ref, atol=2e-2, rtol=2e-2)
    assert jnp.allclose(out_default, ref, atol=2e-2, rtol=2e-2)
    assert jnp.allclose(out_bf16.astype(jnp.float32), ref, atol=3e-2, rtol=3e-2)

    print("KERNEL_OK")
</pallas_src>

<mosaic_0001>
module attributes {stable_mosaic.version = 11 : i64} {
  func.func @autoencoder_kernel(%arg0: i32, %arg1: memref<16x784xf32, #tpu.memory_space<vmem>>, %arg2: memref<784x20xbf16, #tpu.memory_space<vmem>>, %arg3: memref<1x20xf32, #tpu.memory_space<vmem>>, %arg4: memref<20x784xbf16, #tpu.memory_space<vmem>>, %arg5: memref<1x784xf32, #tpu.memory_space<vmem>>, %arg6: memref<16x784xf32, #tpu.memory_space<vmem>>) attributes {dimension_semantics = [#tpu.dimension_semantics<parallel>], iteration_bounds = array<i64: 2>, scalar_prefetch = 0 : i64, scratch_operands = 0 : i64, tpu.core_type = #tpu.core_type<tc>, window_params = [{transform_indices = @transform_0, window_bounds = array<i64: 16, 784>}, {pipeline_mode = #tpu.pipeline_mode<synchronous>, transform_indices = @transform_1, window_bounds = array<i64: 784, 20>}, {pipeline_mode = #tpu.pipeline_mode<synchronous>, transform_indices = @transform_2, window_bounds = array<i64: 1, 20>}, {pipeline_mode = #tpu.pipeline_mode<synchronous>, transform_indices = @transform_3, window_bounds = array<i64: 20, 784>}, {pipeline_mode = #tpu.pipeline_mode<synchronous>, transform_indices = @transform_4, window_bounds = array<i64: 1, 784>}, {transform_indices = @transform_5, window_bounds = array<i64: 16, 784>}]} {
    %c0 = arith.constant 0 : index
    %c0_0 = arith.constant 0 : index
    %0 = vector.load %arg1[%c0, %c0_0] : memref<16x784xf32, #tpu.memory_space<vmem>>, vector<16x784xf32>
    %1 = arith.truncf %0 : vector<16x784xf32> to vector<16x784xbf16>
    %c0_1 = arith.constant 0 : index
    %c0_2 = arith.constant 0 : index
    %2 = vector.load %arg2[%c0_1, %c0_2] : memref<784x20xbf16, #tpu.memory_space<vmem>>, vector<784x20xbf16>
    %cst = arith.constant dense<0.000000e+00> : vector<16x20xf32>
    %3 = tpu.matmul %1, %2, %cst {dimension_numbers = #tpu.dot_dimension_numbers<[1], [0], [0], [1], [0, 0, 1, 1], [], []>} : vector<16x784xbf16>, vector<784x20xbf16>, vector<16x20xf32> -> vector<16x20xf32>
    %c0_3 = arith.constant 0 : index
    %c0_4 = arith.constant 0 : index
    %4 = vector.load %arg3[%c0_3, %c0_4] : memref<1x20xf32, #tpu.memory_space<vmem>>, vector<1x20xf32>
    %5 = vector.broadcast %4 : vector<1x20xf32> to vector<16x20xf32>
    %6 = arith.addf %3, %5 : vector<16x20xf32>
    %cst_5 = arith.constant 0.000000e+00 : f32
    %7 = vector.broadcast %cst_5 : f32 to vector<16x20xf32>
    %8 = arith.maximumf %6, %7 : vector<16x20xf32>
    %9 = arith.truncf %8 : vector<16x20xf32> to vector<16x20xbf16>
    %c0_6 = arith.constant 0 : index
    %c0_7 = arith.constant 0 : index
    %10 = vector.load %arg4[%c0_6, %c0_7] : memref<20x784xbf16, #tpu.memory_space<vmem>>, vector<20x784xbf16>
    %cst_8 = arith.constant dense<0.000000e+00> : vector<16x784xf32>
    %11 = tpu.matmul %9, %10, %cst_8 {dimension_numbers = #tpu.dot_dimension_numbers<[1], [0], [0], [1], [0, 0, 1, 1], [], []>} : vector<16x20xbf16>, vector<20x784xbf16>, vector<16x784xf32> -> vector<16x784xf32>
    %c0_9 = arith.constant 0 : index
    %c0_10 = arith.constant 0 : index
    %12 = vector.load %arg5[%c0_9, %c0_10] : memref<1x784xf32, #tpu.memory_space<vmem>>, vector<1x784xf32>
    %13 = vector.broadcast %12 : vector<1x784xf32> to vector<16x784xf32>
    %14 = arith.addf %11, %13 : vector<16x784xf32>
    %cst_11 = arith.constant 5.000000e-01 : f32
    %15 = vector.broadcast %cst_11 : f32 to vector<16x784xf32>
    %16 = arith.mulf %15, %14 : vector<16x784xf32>
    %17 = math.tanh %16 : vector<16x784xf32>
    %cst_12 = arith.constant 5.000000e-01 : f32
    %18 = vector.broadcast %cst_12 : f32 to vector<16x784xf32>
    %19 = arith.mulf %18, %17 : vector<16x784xf32>
    %cst_13 = arith.constant 5.000000e-01 : f32
    %20 = vector.broadcast %cst_13 : f32 to vector<16x784xf32>
    %21 = arith.addf %19, %20 : vector<16x784xf32>
    %c0_14 = arith.constant 0 : index
    %c0_15 = arith.constant 0 : index
    %22 = vector.load %arg6[%c0_14, %c0_15] : memref<16x784xf32, #tpu.memory_space<vmem>>, vector<16x784xf32>
    tpu.vector_store %arg6[%c0_14, %c0_15], %21 {strides = array<i32>} : memref<16x784xf32, #tpu.memory_space<vmem>>, vector<16x784xf32>,
    return
  }
  func.func @transform_0(%arg0: i32) -> (i32, i32) {
    %c0_i32 = arith.constant 0 : i32
    %c0_i32_0 = arith.constant 0 : i32
    return %arg0, %c0_i32 : i32, i32
  }
  func.func @transform_1(%arg0: i32) -> (i32, i32) {
    %c0_i32 = arith.constant 0 : i32
    %c0_i32_0 = arith.constant 0 : i32
    %c0_i32_1 = arith.constant 0 : i32
    return %c0_i32, %c0_i32_0 : i32, i32
  }
  func.func @transform_2(%arg0: i32) -> (i32, i32) {
    %c0_i32 = arith.constant 0 : i32
    %c0_i32_0 = arith.constant 0 : i32
    %c0_i32_1 = arith.constant 0 : i32
    return %c0_i32, %c0_i32_0 : i32, i32
  }
  func.func @transform_3(%arg0: i32) -> (i32, i32) {
    %c0_i32 = arith.constant 0 : i32
    %c0_i32_0 = arith.constant 0 : i32
    %c0_i32_1 = arith.constant 0 : i32
    return %c0_i32, %c0_i32_0 : i32, i32
  }
  func.func @transform_4(%arg0: i32) -> (i32, i32) {
    %c0_i32 = arith.constant 0 : i32
    %c0_i32_0 = arith.constant 0 : i32
    %c0_i32_1 = arith.constant 0 : i32
    return %c0_i32, %c0_i32_0 : i32, i32
  }
  func.func @transform_5(%arg0: i32) -> (i32, i32) {
    %c0_i32 = arith.constant 0 : i32
    %c0_i32_0 = arith.constant 0 : i32
    return %arg0, %c0_i32 : i32, i32
  }
}

</mosaic_0001>

<llo_original>
// kernel: autoencoder_forward.1
$region0: #{autoencoder_forward.1}
  #allocation0 [shape = 'u32[]', space=smem, size = 0x4, offset = 0x4, fixed_abs, tag = 'smem constant byte address 0x4 - core index']
  #allocation1 [shape = 'u32[144,128]{1,0:T(1,128)}', space=vmem, size = 0x12000, scoped, tag = 'internal scratch']
  %s0 = inlined_call_operand.vmem [shape: f32[24,784], index: 0, kind: input, shape index: {}]
  %s1 = inlined_call_operand.vmem [shape: bf16[784,20], index: 1, kind: input, shape index: {}]
  %s2 = inlined_call_operand.vmem [shape: f32[1,20], index: 2, kind: input, shape index: {}]
  %s3 = inlined_call_operand.vmem [shape: bf16[20,784], index: 3, kind: input, shape index: {}]
  %s4 = inlined_call_operand.vmem [shape: f32[1,784], index: 4, kind: input, shape index: {}]
  %s5 = inlined_call_operand.hbm [shape: f32[24,784], index: 5, kind: output, shape index: {}]
  %s6 = sld [smem:[#allocation0]]
  $region53: #{autoencoder_forward.1} parent=0
    _
  %s8 = ssub.s32 1, %s6
  %s9 = scalar_select 0, %s8, %s6
  $region1: #{autoencoder_forward.1} parent=0
    #allocation2 [shape = 'u8[114688]{0}', space=vmem, size = 0x1c000, scoped, tag = 'output window, operand 0']
    #allocation3 [shape = 's32[2]{0}', space=sflag, size = 0x8, scoped, tag = 'scoped memory for autoencoder_forward.1']
    %10 = vsyncpa [#allocation3], 0
    %s11 = scalar_lea.sflag [#allocation3], 1
    %12 = vsyncpa %s11, 0
    loop: start=0, step=1, limit=4
    $region2: #{autoencoder_forward.1} parent=1 // loop_pre_header
      _
    $region3: #{autoencoder_forward.1} parent=1 // loop_header
      %s14 = sphi 0, %s18
      %p15 = scmp.ge.s32.totalorder %s14, 4
      %s24 = sphi 0, %s26
      %s27 = sphi 0, %s24
      %s28 = sphi 0, %s27
      %s44 = sphi 0, %s28
      %s48 = sphi 0, %s48
      %s50 = sphi 0, %s48
      %s51 = sphi 0, %s50
      %s65 = sphi 0, %s51
      %s69 = sphi 0, %s69
      %s71 = sphi 0, %s69
      %s72 = sphi 0, %s71
      %s86 = sphi 0, %s72
      %s90 = sphi 0, %s90
      %s92 = sphi 0, %s90
      %s93 = sphi 0, %s92
      %s107 = sphi 0, %s93
      %s111 = sphi 0, %s111
      %s113 = sphi 0, %s111
      %s114 = sphi 0, %s113
      %s128 = sphi 0, %s114
      %s134 = sphi 0, %s136
      %s137 = sphi 0, %s134
      %s138 = sphi 0, %s137
      %s154 = sphi 0, %s138
    $region4: #{autoencoder_forward.1} parent=1 // loop_header_branch
      %17 = sbr.rel (%p15) target = $region8
    $region5: #{autoencoder_forward.1} parent=1 // loop_body
      %s19 = ssub.s32 %s14, 1
      %s20 = ssub.s32 %s14, 2
      %s21 = sadd.s32 %s14, 1
      %s22 = ssub.s32 %s14, %s21
      %p23 = scmp.eq.s32.totalorder %s22, 0
      %s25 = sadd.s32 %s24, 1
      %s26 = scalar_select %p23, %s24, %s25
      %p29 = pneg %p23
      %p30 = scmp.eq.s32.totalorder %s14, 1
      %p31 = por %p29, %p30
      %p32 = scmp.ne.s32.totalorder %s24, %s27
      %p33 = scmp.eq.s32.totalorder %s14, 0
      %p34 = por %p32, %p33
      %p35 = scmp.ne.s32.totalorder %s24, %s27
      %p36 = scmp.eq.s32.totalorder %s19, 1
      %p37 = por %p35, %p36
      %p38 = scmp.ne.s32.totalorder %s27, %s28
      %p39 = scmp.eq.s32.totalorder %s19, 0
      %p40 = por %p38, %p39
      %p41 = scmp.ne.s32.totalorder %s27, %s28
      %p42 = scmp.eq.s32.totalorder %s20, 1
      %p43 = por %p41, %p42
      %p45 = scmp.ne.s32.totalorder %s28, %s44
      %p46 = scmp.eq.s32.totalorder %s20, 0
      %p47 = por %p45, %p46
      %s49 = sadd.s32 %s48, 1
      %p52 = scmp.eq.s32.totalorder %s14, 1
      %p53 = scmp.ne.s32.totalorder %s48, %s50
      %p54 = scmp.eq.s32.totalorder %s14, 0
      %p55 = por %p53, %p54
      %p56 = scmp.ne.s32.totalorder %s48, %s50
      %p57 = scmp.eq.s32.totalorder %s19, 1
      %p58 = por %p56, %p57
      %p59 = scmp.ne.s32.totalorder %s50, %s51
      %p60 = scmp.eq.s32.totalorder %s19, 0
      %p61 = por %p59, %p60
      %p62 = scmp.ne.s32.totalorder %s50, %s51
      %p63 = scmp.eq.s32.totalorder %s20, 1
      %p64 = por %p62, %p63
      %p66 = scmp.ne.s32.totalorder %s51, %s65
      %p67 = scmp.eq.s32.totalorder %s20, 0
      %p68 = por %p66, %p67
      %s70 = sadd.s32 %s69, 1
      %p73 = scmp.eq.s32.totalorder %s14, 1
      %p74 = scmp.ne.s32.totalorder %s69, %s71
      %p75 = scmp.eq.s32.totalorder %s14, 0
      %p76 = por %p74, %p75
      %p77 = scmp.ne.s32.totalorder %s69, %s71
      %p78 = scmp.eq.s32.totalorder %s19, 1
      %p79 = por %p77, %p78
      %p80 = scmp.ne.s32.totalorder %s71, %s72
      %p81 = scmp.eq.s32.totalorder %s19, 0
      %p82 = por %p80, %p81
      %p83 = scmp.ne.s32.totalorder %s71, %s72
      %p84 = scmp.eq.s32.totalorder %s20, 1
      %p85 = por %p83, %p84
      %p87 = scmp.ne.s32.totalorder %s72, %s86
      %p88 = scmp.eq.s32.totalorder %s20, 0
      %p89 = por %p87, %p88
      %s91 = sadd.s32 %s90, 1
      %p94 = scmp.eq.s32.totalorder %s14, 1
      %p95 = scmp.ne.s32.totalorder %s90, %s92
      %p96 = scmp.eq.s32.totalorder %s14, 0
      %p97 = por %p95, %p96
      %p98 = scmp.ne.s32.totalorder %s90, %s92
      %p99 = scmp.eq.s32.totalorder %s19, 1
      %p100 = por %p98, %p99
      %p101 = scmp.ne.s32.totalorder %s92, %s93
      %p102 = scmp.eq.s32.totalorder %s19, 0
      %p103 = por %p101, %p102
      %p104 = scmp.ne.s32.totalorder %s92, %s93
      %p105 = scmp.eq.s32.totalorder %s20, 1
      %p106 = por %p104, %p105
      %p108 = scmp.ne.s32.totalorder %s93, %s107
      %p109 = scmp.eq.s32.totalorder %s20, 0
      %p110 = por %p108, %p109
      %s112 = sadd.s32 %s111, 1
      %p115 = scmp.eq.s32.totalorder %s14, 1
      %p116 = scmp.ne.s32.totalorder %s111, %s113
      %p117 = scmp.eq.s32.totalorder %s14, 0
      %p118 = por %p116, %p117
      %p119 = scmp.ne.s32.totalorder %s111, %s113
      %p120 = scmp.eq.s32.totalorder %s19, 1
      %p121 = por %p119, %p120
      %p122 = scmp.ne.s32.totalorder %s113, %s114
      %p123 = scmp.eq.s32.totalorder %s19, 0
      %p124 = por %p122, %p123
      %p125 = scmp.ne.s32.totalorder %s113, %s114
      %p126 = scmp.eq.s32.totalorder %s20, 1
      %p127 = por %p125, %p126
      %p129 = scmp.ne.s32.totalorder %s114, %s128
      %p130 = scmp.eq.s32.totalorder %s20, 0
      %p131 = por %p129, %p130
      %s132 = ssub.s32 %s14, %s21
      %p133 = scmp.eq.s32.totalorder %s132, 0
      %s135 = sadd.s32 %s134, 1
      %s136 = scalar_select %p133, %s134, %s135
      %p139 = pneg %p133
      %p140 = scmp.eq.s32.totalorder %s14, 1
      %p141 = por %p139, %p140
      %p142 = scmp.ne.s32.totalorder %s134, %s137
      %p143 = scmp.eq.s32.totalorder %s14, 0
      %p144 = por %p142, %p143
      %p145 = scmp.ne.s32.totalorder %s134, %s137
      %p146 = scmp.eq.s32.totalorder %s19, 1
      %p147 = por %p145, %p146
      %p148 = scmp.ne.s32.totalorder %s137, %s138
      %p149 = scmp.eq.s32.totalorder %s19, 0
      %p150 = por %p148, %p149
      %p151 = scmp.ne.s32.totalorder %s137, %s138
      %p152 = scmp.eq.s32.totalorder %s20, 1
      %p153 = por %p151, %p152
      %p155 = scmp.ne.s32.totalorder %s138, %s154
      %p156 = scmp.eq.s32.totalorder %s20, 0
      %p157 = por %p155, %p156
      %p158 = scmp.le.s32.totalorder 1, %s14
      %p159 = scmp.lt.s32.totalorder %s14, 3
      %p160 = pnand %p158, %p159
      %p161 = pneg %p160
      // Predicated region
      $region9: #{autoencoder_forward.1} parent=5 // pred_check
        _
      $region10: #{autoencoder_forward.1} parent=5 // pred_check_branch
        %163 = sbr.rel (%p160) target = $region12
      $region11: #{autoencoder_forward.1} parent=5 // pred_region
        %s164 = ssub.s32 %s14, 1
        // Predicated region
        $region13: #{autoencoder_forward.1} parent=11 // pred_check
          %p165 = pneg %p61
        $region14: #{autoencoder_forward.1} parent=11 // pred_check_branch
          %167 = sbr.rel (%p165) target = $region16
        $region15: #{autoencoder_forward.1} parent=11 // pred_region
          _
        $region16: #{autoencoder_forward.1} parent=11 // pred_fallthru
          _
        // Predicated region
        $region17: #{autoencoder_forward.1} parent=11 // pred_check
          %p168 = pneg %p82
        $region18: #{autoencoder_forward.1} parent=11 // pred_check_branch
          %170 = sbr.rel (%p168) target = $region20
        $region19: #{autoencoder_forward.1} parent=11 // pred_region
          _
        $region20: #{autoencoder_forward.1} parent=11 // pred_fallthru
          _
        // Predicated region
        $region21: #{autoencoder_forward.1} parent=11 // pred_check
          %p171 = pneg %p103
        $region22: #{autoencoder_forward.1} parent=11 // pred_check_branch
          %173 = sbr.rel (%p171) target = $region24
        $region23: #{autoencoder_forward.1} parent=11 // pred_region
          _
        $region24: #{autoencoder_forward.1} parent=11 // pred_fallthru
          _
        // Predicated region
        $region25: #{autoencoder_forward.1} parent=11 // pred_check
          %p174 = pneg %p124
        $region26: #{autoencoder_forward.1} parent=11 // pred_check_branch
          %176 = sbr.rel (%p174) target = $region28
        $region27: #{autoencoder_forward.1} parent=11 // pred_region
          _
        $region28: #{autoencoder_forward.1} parent=11 // pred_fallthru
          _
      $region12: #{autoencoder_forward.1} parent=5 // pred_fallthru
        _
      %p177 = scmp.lt.s32.totalorder %s14, 2
      // Predicated region
      $region29: #{autoencoder_forward.1} parent=5 // pred_check
        %p178 = pneg %p177
      $region30: #{autoencoder_forward.1} parent=5 // pred_check_branch
        %180 = sbr.rel (%p178) target = $region32
      $region31: #{autoencoder_forward.1} parent=5 // pred_region
        // Predicated region
        $region33: #{autoencoder_forward.1} parent=31 // pred_check
          %p181 = pneg %p34
        $region34: #{autoencoder_forward.1} parent=31 // pred_check_branch
          %183 = sbr.rel (%p181) target = $region36
        $region35: #{autoencoder_forward.1} parent=31 // pred_region
          %s184 = smul.u32 2, %s14
          %s185 = ssub.s32 3, %s184
          %p186 = scmp.lt.s32.totalorder %s185, 2
          %s187 = scalar_select %p186, %s185, 2
          %s188 = smul.u32 128, %s187
          %s189 = smul.u32 %s188, 7
          %p190 = scmp.lt.s32.totalorder %s184, 2
          %s191 = scalar_select %p190, %s184, 2
          %s192 = smul.addr %s191, 7
          %s193 = smul.addr %s192, 8
          %s194 = scalar_lea.vmem %s0, %s193
          %s195 = smul.u32 2, %s14
          %s196 = ssub.s32 3, %s195
          %p197 = scmp.lt.s32.totalorder %s196, 2
          %s198 = scalar_select %p197, %s196, 2
          %s199 = smul.u32 128, %s198
          %s200 = smul.u32 %s199, 7
        $region36: #{autoencoder_forward.1} parent=31 // pred_fallthru
          _
      $region32: #{autoencoder_forward.1} parent=5 // pred_fallthru
        _
      %p201 = scmp.le.s32.totalorder 1, %s14
      %p202 = scmp.lt.s32.totalorder %s14, 3
      %p203 = pnand %p201, %p202
      %p204 = pneg %p203
      // Predicated region
      $region37: #{autoencoder_forward.1} parent=5 // pred_check
        _
      $region38: #{autoencoder_forward.1} parent=5 // pred_check_branch
        %206 = sbr.rel (%p203) target = $region40
      $region39: #{autoencoder_forward.1} parent=5 // pred_region
        %s207 = ssub.s32 %s14, 1
        %s208 = smul.u32 2, %s19
        %s209 = ssub.s32 3, %s208
        %p210 = scmp.lt.s32.totalorder %s209, 2
        %s211 = scalar_select %p210, %s209, 2
        %s212 = smul.u32 128, %s211
        %s213 = smul.u32 %s212, 7
        %p214 = scmp.lt.s32.totalorder %s208, 2
        %s215 = scalar_select %p214, %s208, 2
        %s216 = smul.addr %s215, 7
        %s217 = smul.addr %s216, 8
        %s218 = scalar_lea.vmem %s0, %s217
        %p219 = pneg %p40
        %p220 = pneg %p37
        %p221 = pneg %p61
        %p222 = pneg %p58
        %p223 = pneg %p82
        %p224 = pneg %p79
        %p225 = pneg %p103
        %p226 = pneg %p100
        %p227 = pneg %p124
        %p228 = pneg %p121
        %p229 = pneg %p150
        %p230 = pneg %p147
        %s231 = sand.u32 %s137, 1
        %s232 = scalar_lea.sflag [#allocation3], %s231
        %s233 = sand.u32 %s137, 1
        %s234 = smul.addr %s233, 112
        %s235 = scalar_lea.vmem [#allocation2], %s234
        %s236 = smul.u32 2, %s19
        %s237 = ssub.s32 3, %s236
        %p238 = scmp.lt.s32.totalorder %s237, 2
        %s239 = scalar_select %p238, %s237, 2
        %s240 = smul.u32 128, %s239
        %s241 = smul.u32 %s240, 7
        %p242 = scmp.lt.s32.totalorder %s236, 2
        %s243 = scalar_select %p242, %s236, 2
        %s244 = smul.addr %s243, 7
        %s245 = smul.addr %s244, 8
        %s246 = scalar_lea.vmem %s0, %s245
        %s247 = smul.u32 2, %s19
        %s248 = ssub.s32 3, %s247
        %p249 = scmp.lt.s32.totalorder %s248, 2
        %s250 = scalar_select %p249, %s248, 2
        %s251 = smul.u32 128, %s250
        %s252 = smul.u32 %s251, 7
        %s253 = smul.u32 2, %s19
        %s254 = ssub.s32 3, %s253
        %p255 = scmp.lt.s32.totalorder %s254, 2
        %s256 = scalar_select %p255, %s254, 2
        %s257 = smul.u32 128, %s256
        %s258 = smul.u32 %s257, 7
        %v260 = vld [vmem:[%s246] sm:$0xff]
        %v261 = vld [vmem:[%s246 + $0x8] sm:$0xff]
        %v262 = vld [vmem:[%s246 + $0x10] sm:$0xff]
        %v263 = vld [vmem:[%s246 + $0x18] sm:$0xff]
        %v264 = vld [vmem:[%s246 + $0x20] sm:$0xff]
        %v265 = vld [vmem:[%s246 + $0x28] sm:$0xff]
        %v266 = vld [vmem:[%s246 + $0x30] sm:$0xff]
        %v267 = vld [vmem:[%s246 + $0x38] sm:$0xff]
        %v268 = vld [vmem:[%s246 + $0x40] sm:$0xff]
        %v269 = vld [vmem:[%s246 + $0x48] sm:$0xff]
        %v270 = vld [vmem:[%s246 + $0x50] sm:$0xff]
        %v271 = vld [vmem:[%s246 + $0x58] sm:$0xff]
        %v272 = vld [vmem:[%s246 + $0x60] sm:$0xff]
        %v273 = vld [vmem:[%s246 + $0x68] sm:$0xff]
        %v274 = vpack.c.bf16 %v267, %v260
        %v275 = vpack.c.bf16 %v268, %v261
        %v276 = vpack.c.bf16 %v269, %v262
        %v277 = vpack.c.bf16 %v270, %v263
        %v278 = vpack.c.bf16 %v271, %v264
        %v279 = vpack.c.bf16 %v272, %v265
        %v280 = vpack.c.bf16 %v273, %v266
        %v281 = vld [vmem:[%s1] sm:$0xf]
        %v282 = vld [vmem:[%s1 + $0x4] sm:$0xf]
        %v283 = vld [vmem:[%s1 + $0x8] sm:$0xf]
        %v284 = vld [vmem:[%s1 + $0xc] sm:$0xf]
        %v285 = vld [vmem:[%s1 + $0x10] sm:$0xf]
        %v286 = vld [vmem:[%s1 + $0x14] sm:$0xf]
        %v287 = vld [vmem:[%s1 + $0x18] sm:$0xf]
        %v288 = vld [vmem:[%s1 + $0x1c] sm:$0xf]
        %v289 = vld [vmem:[%s1 + $0x20] sm:$0xf]
        %v290 = vld [vmem:[%s1 + $0x24] sm:$0xf]
        %v291 = vld [vmem:[%s1 + $0x28] sm:$0xf]
        %v292 = vld [vmem:[%s1 + $0x2c] sm:$0xf]
        %v293 = vld [vmem:[%s1 + $0x30] sm:$0xf]
        %v294 = vld [vmem:[%s1 + $0x34] sm:$0xf]
        %v295 = vld [vmem:[%s1 + $0x38] sm:$0xf]
        %v296 = vld [vmem:[%s1 + $0x3c] sm:$0xf]
        %v297 = vld [vmem:[%s1 + $0x40] sm:$0xf]
        %v298 = vld [vmem:[%s1 + $0x44] sm:$0xf]
        %v299 = vld [vmem:[%s1 + $0x48] sm:$0xf]
        %v300 = vld [vmem:[%s1 + $0x4c] sm:$0xf]
        %v301 = vld [vmem:[%s1 + $0x50] sm:$0xf]
        %v302 = vld [vmem:[%s1 + $0x54] sm:$0xf]
        %v303 = vld [vmem:[%s1 + $0x58] sm:$0xf]
        %v304 = vld [vmem:[%s1 + $0x5c] sm:$0xf]
        %v305 = vld [vmem:[%s1 + $0x60] sm:$0xf]
        %v306 = vld [vmem:[%s1 + $0x64] sm:$0xf]
        %v307 = vld [vmem:[%s1 + $0x68] sm:$0xf]
        %v308 = vld [vmem:[%s1 + $0x6c] sm:$0xf]
        %v309 = vld [vmem:[%s1 + $0x70] sm:$0xf]
        %v310 = vld [vmem:[%s1 + $0x74] sm:$0xf]
        %v311 = vld [vmem:[%s1 + $0x78] sm:$0xf]
        %v312 = vld [vmem:[%s1 + $0x7c] sm:$0xf]
        %v313 = vld [vmem:[%s1 + $0x80] sm:$0xf]
        %v314 = vld [vmem:[%s1 + $0x84] sm:$0xf]
        %v315 = vld [vmem:[%s1 + $0x88] sm:$0xf]
        %v316 = vld [vmem:[%s1 + $0x8c] sm:$0xf]
        %v317 = vld [vmem:[%s1 + $0x90] sm:$0xf]
        %v318 = vld [vmem:[%s1 + $0x94] sm:$0xf]
        %v319 = vld [vmem:[%s1 + $0x98] sm:$0xf]
        %v320 = vld [vmem:[%s1 + $0x9c] sm:$0xf]
        %v321 = vld [vmem:[%s1 + $0xa0] sm:$0xf]
        %v322 = vld [vmem:[%s1 + $0xa4] sm:$0xf]
        %v323 = vld [vmem:[%s1 + $0xa8] sm:$0xf]
        %v324 = vld [vmem:[%s1 + $0xac] sm:$0xf]
        %v325 = vld [vmem:[%s1 + $0xb0] sm:$0xf]
        %v326 = vld [vmem:[%s1 + $0xb4] sm:$0xf]
        %v327 = vld [vmem:[%s1 + $0xb8] sm:$0xf]
        %v328 = vld [vmem:[%s1 + $0xbc] sm:$0xf]
        %v329 = vld [vmem:[%s1 + $0xc0] sm:$0xf]
        %v330 = vld [vmem:[%s1 + $0xc4] sm:$0xf]
        %v331 = vld [vmem:[%s1 + $0xc8] sm:$0xf]
        %v332 = vld [vmem:[%s1 + $0xcc] sm:$0xf]
        %v333 = vld [vmem:[%s1 + $0xd0] sm:$0xf]
        %v334 = vld [vmem:[%s1 + $0xd4] sm:$0xf]
        %v335 = vld [vmem:[%s1 + $0xd8] sm:$0xf]
        %v336 = vld [vmem:[%s1 + $0xdc] sm:$0xf]
        %v337 = vld [vmem:[%s1 + $0xe0] sm:$0xf]
        %v338 = vld [vmem:[%s1 + $0xe4] sm:$0xf]
        %v339 = vld [vmem:[%s1 + $0xe8] sm:$0xf]
        %v340 = vld [vmem:[%s1 + $0xec] sm:$0xf]
        %v341 = vld [vmem:[%s1 + $0xf0] sm:$0xf]
        %v342 = vld [vmem:[%s1 + $0xf4] sm:$0xf]
        %v343 = vld [vmem:[%s1 + $0xf8] sm:$0xf]
        %v344 = vld [vmem:[%s1 + $0xfc] sm:$0xf]
        %v345 = vld [vmem:[%s1 + $0x100] sm:$0xf]
        %v346 = vld [vmem:[%s1 + $0x104] sm:$0xf]
        %v347 = vld [vmem:[%s1 + $0x108] sm:$0xf]
        %v348 = vld [vmem:[%s1 + $0x10c] sm:$0xf]
        %v349 = vld [vmem:[%s1 + $0x110] sm:$0xf]
        %v350 = vld [vmem:[%s1 + $0x114] sm:$0xf]
        %v351 = vld [vmem:[%s1 + $0x118] sm:$0xf]
        %v352 = vld [vmem:[%s1 + $0x11c] sm:$0xf]
        %v353 = vld [vmem:[%s1 + $0x120] sm:$0xf]
        %v354 = vld [vmem:[%s1 + $0x124] sm:$0xf]
        %v355 = vld [vmem:[%s1 + $0x128] sm:$0xf]
        %v356 = vld [vmem:[%s1 + $0x12c] sm:$0xf]
        %v357 = vld [vmem:[%s1 + $0x130] sm:$0xf]
        %v358 = vld [vmem:[%s1 + $0x134] sm:$0xf]
        %v359 = vld [vmem:[%s1 + $0x138] sm:$0xf]
        %v360 = vld [vmem:[%s1 + $0x13c] sm:$0xf]
        %v361 = vld [vmem:[%s1 + $0x140] sm:$0xf]
        %v362 = vld [vmem:[%s1 + $0x144] sm:$0xf]
        %v363 = vld [vmem:[%s1 + $0x148] sm:$0xf]
        %v364 = vld [vmem:[%s1 + $0x14c] sm:$0xf]
        %v365 = vld [vmem:[%s1 + $0x150] sm:$0xf]
        %v366 = vld [vmem:[%s1 + $0x154] sm:$0xf]
        %v367 = vld [vmem:[%s1 + $0x158] sm:$0xf]
        %v368 = vld [vmem:[%s1 + $0x15c] sm:$0xf]
        %v369 = vld [vmem:[%s1 + $0x160] sm:$0xf]
        %v370 = vld [vmem:[%s1 + $0x164] sm:$0xf]
        %v371 = vld [vmem:[%s1 + $0x168] sm:$0xf]
        %v372 = vld [vmem:[%s1 + $0x16c] sm:$0xf]
        %v373 = vld [vmem:[%s1 + $0x170] sm:$0xf]
        %v374 = vld [vmem:[%s1 + $0x174] sm:$0xf]
        %v375 = vld [vmem:[%s1 + $0x178] sm:$0xf]
        %v376 = vld [vmem:[%s1 + $0x17c] sm:$0xf]
        %v377 = vld [vmem:[%s1 + $0x180] sm:$0xf]
        %v378 = vld [vmem:[%s1 + $0x184] sm:$0xf]
        %v379 = vld [vmem:[%s2] sm:$0x1]
        %v381 = vlaneseq
        %v382 = vshrl.u32 %v381, 7
        %v383 = vsub.s32 0, %v382
        %v384 = vrot.slane %v379, %v383
        %v484 = vunpack.c.l.b16 %v281
        %v485 = vunpack.c.l.b16 %v282
        %v486 = vunpack.c.l.b16 %v283
        %v487 = vunpack.c.l.b16 %v284
        %v488 = vunpack.c.l.b16 %v285
        %v489 = vunpack.c.l.b16 %v286
        %v490 = vunpack.c.l.b16 %v287
        %v491 = vunpack.c.l.b16 %v288
        %v492 = vunpack.c.l.b16 %v289
        %v493 = vunpack.c.l.b16 %v290
        %v494 = vunpack.c.l.b16 %v291
        %v495 = vunpack.c.l.b16 %v292
        %v496 = vunpack.c.l.b16 %v293
        %v497 = vunpack.c.l.b16 %v294
        %v498 = vunpack.c.l.b16 %v295
        %v499 = vunpack.c.l.b16 %v296
        %v500 = vunpack.c.l.b16 %v297
        %v501 = vunpack.c.l.b16 %v298
        %v502 = vunpack.c.l.b16 %v299
        %v503 = vunpack.c.l.b16 %v300
        %v504 = vunpack.c.l.b16 %v301
        %v505 = vunpack.c.l.b16 %v302
        %v506 = vunpack.c.l.b16 %v303
        %v507 = vunpack.c.l.b16 %v304
        %v508 = vunpack.c.l.b16 %v305
        %v509 = vunpack.c.l.b16 %v306
        %v510 = vunpack.c.l.b16 %v307
        %v511 = vunpack.c.l.b16 %v308
        %v512 = vunpack.c.l.b16 %v309
        %v513 = vunpack.c.l.b16 %v310
        %v514 = vunpack.c.l.b16 %v311
        %v515 = vunpack.c.l.b16 %v312
        %v516 = vunpack.c.l.b16 %v313
        %v517 = vunpack.c.l.b16 %v314
        %v518 = vunpack.c.l.b16 %v315
        %v519 = vunpack.c.l.b16 %v316
        %v520 = vunpack.c.l.b16 %v317
        %v521 = vunpack.c.l.b16 %v318
        %v522 = vunpack.c.l.b16 %v319
        %v523 = vunpack.c.l.b16 %v320
        %v524 = vunpack.c.l.b16 %v321
        %v525 = vunpack.c.l.b16 %v322
        %v526 = vunpack.c.l.b16 %v323
        %v527 = vunpack.c.l.b16 %v324
        %v528 = vunpack.c.l.b16 %v325
        %v529 = vunpack.c.l.b16 %v326
        %v530 = vunpack.c.l.b16 %v327
        %v531 = vunpack.c.l.b16 %v328
        %v532 = vunpack.c.l.b16 %v329
        %v533 = vunpack.c.l.b16 %v330
        %v534 = vunpack.c.l.b16 %v331
        %v535 = vunpack.c.l.b16 %v332
        %v536 = vunpack.c.l.b16 %v333
        %v537 = vunpack.c.l.b16 %v334
        %v538 = vunpack.c.l.b16 %v335
        %v539 = vunpack.c.l.b16 %v336
        %v540 = vunpack.c.l.b16 %v337
        %v541 = vunpack.c.l.b16 %v338
        %v542 = vunpack.c.l.b16 %v339
        %v543 = vunpack.c.l.b16 %v340
        %v544 = vunpack.c.l.b16 %v341
        %v545 = vunpack.c.l.b16 %v342
        %v546 = vunpack.c.l.b16 %v343
        %v547 = vunpack.c.l.b16 %v344
        %v548 = vunpack.c.l.b16 %v345
        %v549 = vunpack.c.l.b16 %v346
        %v550 = vunpack.c.l.b16 %v347
        %v551 = vunpack.c.l.b16 %v348
        %v552 = vunpack.c.l.b16 %v349
        %v553 = vunpack.c.l.b16 %v350
        %v554 = vunpack.c.l.b16 %v351
        %v555 = vunpack.c.l.b16 %v352
        %v556 = vunpack.c.l.b16 %v353
        %v557 = vunpack.c.l.b16 %v354
        %v558 = vunpack.c.l.b16 %v355
        %v559 = vunpack.c.l.b16 %v356
        %v560 = vunpack.c.l.b16 %v357
        %v561 = vunpack.c.l.b16 %v358
        %v562 = vunpack.c.l.b16 %v359
        %v563 = vunpack.c.l.b16 %v360
        %v564 = vunpack.c.l.b16 %v361
        %v565 = vunpack.c.l.b16 %v362
        %v566 = vunpack.c.l.b16 %v363
        %v567 = vunpack.c.l.b16 %v364
        %v568 = vunpack.c.l.b16 %v365
        %v569 = vunpack.c.l.b16 %v366
        %v570 = vunpack.c.l.b16 %v367
        %v571 = vunpack.c.l.b16 %v368
        %v572 = vunpack.c.l.b16 %v369
        %v573 = vunpack.c.l.b16 %v370
        %v574 = vunpack.c.l.b16 %v371
        %v575 = vunpack.c.l.b16 %v372
        %v576 = vunpack.c.l.b16 %v373
        %v577 = vunpack.c.l.b16 %v374
        %v578 = vunpack.c.l.b16 %v375
        %v579 = vunpack.c.l.b16 %v376
        %v580 = vunpack.c.l.b16 %v377
        %v581 = vunpack.c.l.b16 %v378
        %v582 = vpack.c.b16 %v485, %v484
        %v583 = vpack.c.b16 %v487, %v486
        %v584 = vpack.c.b16 %v489, %v488
        %v585 = vpack.c.b16 %v491, %v490
        %v586 = vpack.c.b16 %v493, %v492
        %v587 = vpack.c.b16 %v495, %v494
        %v588 = vpack.c.b16 %v497, %v496
        %v589 = vpack.c.b16 %v499, %v498
        %v590 = vpack.c.b16 %v501, %v500
        %v591 = vpack.c.b16 %v503, %v502
        %v592 = vpack.c.b16 %v505, %v504
        %v593 = vpack.c.b16 %v507, %v506
        %v594 = vpack.c.b16 %v509, %v508
        %v595 = vpack.c.b16 %v511, %v510
        %v596 = vpack.c.b16 %v513, %v512
        %v597 = vpack.c.b16 %v515, %v514
        %v598 = vpack.c.b16 %v517, %v516
        %v599 = vpack.c.b16 %v519, %v518
        %v600 = vpack.c.b16 %v521, %v520
        %v601 = vpack.c.b16 %v523, %v522
        %v602 = vpack.c.b16 %v525, %v524
        %v603 = vpack.c.b16 %v527, %v526
        %v604 = vpack.c.b16 %v529, %v528
        %v605 = vpack.c.b16 %v531, %v530
        %v606 = vpack.c.b16 %v533, %v532
        %v607 = vpack.c.b16 %v535, %v534
        %v608 = vpack.c.b16 %v537, %v536
        %v609 = vpack.c.b16 %v539, %v538
        %v610 = vpack.c.b16 %v541, %v540
        %v611 = vpack.c.b16 %v543, %v542
        %v612 = vpack.c.b16 %v545, %v544
        %v613 = vpack.c.b16 %v547, %v546
        %v614 = vpack.c.b16 %v549, %v548
        %v615 = vpack.c.b16 %v551, %v550
        %v616 = vpack.c.b16 %v553, %v552
        %v617 = vpack.c.b16 %v555, %v554
        %v618 = vpack.c.b16 %v557, %v556
        %v619 = vpack.c.b16 %v559, %v558
        %v620 = vpack.c.b16 %v561, %v560
        %v621 = vpack.c.b16 %v563, %v562
        %v622 = vpack.c.b16 %v565, %v564
        %v623 = vpack.c.b16 %v567, %v566
        %v624 = vpack.c.b16 %v569, %v568
        %v625 = vpack.c.b16 %v571, %v570
        %v626 = vpack.c.b16 %v573, %v572
        %v627 = vpack.c.b16 %v575, %v574
        %v628 = vpack.c.b16 %v577, %v576
        %v629 = vpack.c.b16 %v579, %v578
        %v630 = vpack.c.b16 %v581, %v580
        %vm680 = vcmask 130048
        %v682 = vsel %vm680, %v280, 0
        %684 = vmatprep.subr.bf16.mxu0 0
        %685 = vmatpush1.bf16.msra.mxu0 %v582
        %686 = vmatprep.subr.bf16.mxu0 0
        %687 = vmatpush1.bf16.msra.mxu0 %v583
        %688 = vmatprep.subr.bf16.mxu0 0
        %689 = vmatpush1.bf16.msra.mxu0 %v584
        %690 = vmatprep.subr.bf16.mxu0 0
        %691 = vmatpush1.bf16.msra.mxu0 %v585
        %692 = vmatprep.subr.bf16.mxu0 0
        %693 = vmatpush1.bf16.msra.mxu0 %v586
        %694 = vmatprep.subr.bf16.mxu0 0
        %695 = vmatpush1.bf16.msra.mxu0 %v587
        %696 = vmatprep.subr.bf16.mxu0 0
        %697 = vmatpush1.bf16.msra.mxu0 %v588
        %698 = vmatprep.subr.bf16.mxu0 0
        %699 = vmatpush1.bf16.msra.mxu0 %v589
        %700 = vmatprep.subr.bf16.mxu0 0
        %701 = vmatpush1.bf16.msra.mxu0 %v590
        %702 = vmatprep.subr.bf16.mxu0 0
        %703 = vmatpush1.bf16.msra.mxu0 %v591
        %704 = vmatprep.subr.bf16.mxu0 0
        %705 = vmatpush1.bf16.msra.mxu0 %v592
        %706 = vmatprep.subr.bf16.mxu0 0
        %707 = vmatpush1.bf16.msra.mxu0 %v593
        %708 = vmatprep.subr.bf16.mxu0 0
        %709 = vmatpush1.bf16.msra.mxu0 %v594
        %710 = vmatprep.subr.bf16.mxu0 0
        %711 = vmatpush1.bf16.msra.mxu0 %v595
        %712 = vmatprep.subr.bf16.mxu0 0
        %713 = vmatpush1.bf16.msra.mxu0 %v596
        %714 = vmatprep.subr.bf16.mxu0 0
        %715 = vmatpush1.bf16.msra.mxu0 %v597
        %716 = vmatprep.mubr.bf16.mxu0 %v275
        %717 = vmatmul.mubr.bf16.gmra.mrb[0].mxu0 %v274
        %v718 = vpop.f32.mrb[0].mxu0
        %v719 = vadd.f32 %v384, %v718
        %v720 = vpop.f32.mrb[0].mxu0
        %v721 = vpop.f32.mrb[0].mxu0
        %v722 = vadd.f32 %v384, %v721
        %v723 = vpop.f32.mrb[0].mxu0
        %724 = vdwg.mxu0
        %725 = vmatprep.subr.bf16.mxu0 0
        %726 = vmatpush1.bf16.msra.mxu0 %v598
        %727 = vmatprep.subr.bf16.mxu0 0
        %728 = vmatpush1.bf16.msra.mxu0 %v599
        %729 = vmatprep.subr.bf16.mxu0 0
        %730 = vmatpush1.bf16.msra.mxu0 %v600
        %731 = vmatprep.subr.bf16.mxu0 0
        %732 = vmatpush1.bf16.msra.mxu0 %v601
        %733 = vmatprep.subr.bf16.mxu0 0
        %734 = vmatpush1.bf16.msra.mxu0 %v602
        %735 = vmatprep.subr.bf16.mxu0 0
        %736 = vmatpush1.bf16.msra.mxu0 %v603
        %737 = vmatprep.subr.bf16.mxu0 0
        %738 = vmatpush1.bf16.msra.mxu0 %v604
        %739 = vmatprep.subr.bf16.mxu0 0
        %740 = vmatpush1.bf16.msra.mxu0 %v605
        %741 = vmatprep.subr.bf16.mxu0 0
        %742 = vmatpush1.bf16.msra.mxu0 %v606
        %743 = vmatprep.subr.bf16.mxu0 0
        %744 = vmatpush1.bf16.msra.mxu0 %v607
        %745 = vmatprep.subr.bf16.mxu0 0
        %746 = vmatpush1.bf16.msra.mxu0 %v608
        %747 = vmatprep.subr.bf16.mxu0 0
        %748 = vmatpush1.bf16.msra.mxu0 %v609
        %749 = vmatprep.subr.bf16.mxu0 0
        %750 = vmatpush1.bf16.msra.mxu0 %v610
        %751 = vmatprep.subr.bf16.mxu0 0
        %752 = vmatpush1.bf16.msra.mxu0 %v611
        %753 = vmatprep.subr.bf16.mxu0 0
        %754 = vmatpush1.bf16.msra.mxu0 %v612
        %755 = vmatprep.subr.bf16.mxu0 0
        %756 = vmatpush1.bf16.msra.mxu0 %v613
        %757 = vmatprep.mubr.bf16.mxu0 %v277
        %758 = vmatmul.mubr.bf16.gmra.mrb[0].mxu0 %v276
        %v759 = vpop.f32.mrb[0].mxu0
        %v760 = vadd.f32 %v719, %v759
        %v761 = vpop.f32.mrb[0].mxu0
        %v762 = vpop.f32.mrb[0].mxu0
        %v763 = vadd.f32 %v722, %v762
        %v764 = vpop.f32.mrb[0].mxu0
        %765 = vdwg.mxu0
        %766 = vmatprep.subr.bf16.mxu0 0
        %767 = vmatpush1.bf16.msra.mxu0 %v614
        %768 = vmatprep.subr.bf16.mxu0 0
        %769 = vmatpush1.bf16.msra.mxu0 %v615
        %770 = vmatprep.subr.bf16.mxu0 0
        %771 = vmatpush1.bf16.msra.mxu0 %v616
        %772 = vmatprep.subr.bf16.mxu0 0
        %773 = vmatpush1.bf16.msra.mxu0 %v617
        %774 = vmatprep.subr.bf16.mxu0 0
        %775 = vmatpush1.bf16.msra.mxu0 %v618
        %776 = vmatprep.subr.bf16.mxu0 0
        %777 = vmatpush1.bf16.msra.mxu0 %v619
        %778 = vmatprep.subr.bf16.mxu0 0
        %779 = vmatpush1.bf16.msra.mxu0 %v620
        %780 = vmatprep.subr.bf16.mxu0 0
        %781 = vmatpush1.bf16.msra.mxu0 %v621
        %782 = vmatprep.subr.bf16.mxu0 0
        %783 = vmatpush1.bf16.msra.mxu0 %v622
        %784 = vmatprep.subr.bf16.mxu0 0
        %785 = vmatpush1.bf16.msra.mxu0 %v623
        %786 = vmatprep.subr.bf16.mxu0 0
        %787 = vmatpush1.bf16.msra.mxu0 %v624
        %788 = vmatprep.subr.bf16.mxu0 0
        %789 = vmatpush1.bf16.msra.mxu0 %v625
        %790 = vmatprep.subr.bf16.mxu0 0
        %791 = vmatpush1.bf16.msra.mxu0 %v626
        %792 = vmatprep.subr.bf16.mxu0 0
        %793 = vmatpush1.bf16.msra.mxu0 %v627
        %794 = vmatprep.subr.bf16.mxu0 0
        %795 = vmatpush1.bf16.msra.mxu0 %v628
        %796 = vmatprep.subr.bf16.mxu0 0
        %797 = vmatpush1.bf16.msra.mxu0 %v629
        %798 = vmatprep.mubr.bf16.mxu0 %v279
        %799 = vmatmul.mubr.bf16.gmra.mrb[0].mxu0 %v278
        %v800 = vpop.f32.mrb[0].mxu0
        %v801 = vadd.f32 %v760, %v800
        %v802 = vpop.f32.mrb[0].mxu0
        %v803 = vpop.f32.mrb[0].mxu0
        %v804 = vadd.f32 %v763, %v803
        %v805 = vpop.f32.mrb[0].mxu0
        %806 = vdwg.mxu0
        %807 = vmatprep.subr.bf16.mxu0 0
        %808 = vmatpush1.bf16.msra.mxu0 %v630
        %809 = vmatprep.subr.bf16.mxu0 0
        %810 = vmatpush1.bf16.msra.mxu0 0
        %811 = vmatprep.subr.bf16.mxu0 0
        %812 = vmatpush1.bf16.msra.mxu0 0
        %813 = vmatprep.subr.bf16.mxu0 0
        %814 = vmatpush1.bf16.msra.mxu0 0
        %815 = vmatprep.subr.bf16.mxu0 0
        %816 = vmatpush1.bf16.msra.mxu0 0
        %817 = vmatprep.subr.bf16.mxu0 0
        %818 = vmatpush1.bf16.msra.mxu0 0
        %819 = vmatprep.subr.bf16.mxu0 0
        %820 = vmatpush1.bf16.msra.mxu0 0
        %821 = vmatprep.subr.bf16.mxu0 0
        %822 = vmatpush1.bf16.msra.mxu0 0
        %823 = vmatprep.subr.bf16.mxu0 0
        %824 = vmatpush1.bf16.msra.mxu0 0
        %825 = vmatprep.subr.bf16.mxu0 0
        %826 = vmatpush1.bf16.msra.mxu0 0
        %827 = vmatprep.subr.bf16.mxu0 0
        %828 = vmatpush1.bf16.msra.mxu0 0
        %829 = vmatprep.subr.bf16.mxu0 0
        %830 = vmatpush1.bf16.msra.mxu0 0
        %831 = vmatprep.subr.bf16.mxu0 0
        %832 = vmatpush1.bf16.msra.mxu0 0
        %833 = vmatprep.subr.bf16.mxu0 0
        %834 = vmatpush1.bf16.msra.mxu0 0
        %835 = vmatprep.subr.bf16.mxu0 0
        %836 = vmatpush1.bf16.msra.mxu0 0
        %837 = vmatprep.subr.bf16.mxu0 0
        %838 = vmatpush1.bf16.msra.mxu0 0
        %839 = vmatprep.mubr.bf16.mxu0 0
        %840 = vmatmul.mubr.bf16.gmra.mrb[0].mxu0 %v682
        %v841 = vpop.f32.mrb[0].mxu0
        %v842 = vadd.f32 %v801, %v841
        %v843 = vpop.f32.mrb[0].mxu0
        %v844 = vpop.f32.mrb[0].mxu0
        %v845 = vadd.f32 %v804, %v844
        %v846 = vpop.f32.mrb[0].mxu0
        %847 = vdwg.mxu0
        %v848 = vmax.f32 %v842, 0.0
        %v849 = vmax.f32 %v845, 0.0
        %v850 = vpack.c.bf16 %v849, %v848
        %v851 = vld [vmem:[%s3] sm:$0xff]
        %v852 = vld [vmem:[%s3 + $0x8] sm:$0xff]
        %v853 = vld [vmem:[%s3 + $0x10] sm:$0xff]
        %v854 = vld [vmem:[%s3 + $0x18] sm:$0xf]
        %v855 = vld [vmem:[%s3 + $0x1c] sm:$0xff]
        %v856 = vld [vmem:[%s3 + $0x24] sm:$0xff]
        %v857 = vld [vmem:[%s3 + $0x2c] sm:$0xff]
        %v858 = vld [vmem:[%s3 + $0x34] sm:$0xf]
        %v859 = vld [vmem:[%s3 + $0x38] sm:$0x33]
        %v860 = vld [vmem:[%s3 + $0x40] sm:$0x33]
        %v861 = vld [vmem:[%s3 + $0x48] sm:$0x33]
        %v862 = vld [vmem:[%s3 + $0x50] sm:$0x3]
        %v863 = vld [vmem:[%s4] sm:$0x7f]
        %v865 = vlaneseq
        %v866 = vshrl.u32 %v865, 7
        %v867 = vsub.s32 0, %v866
        %v868 = vrot.slane %v863, %v867
        %v869 = vlaneseq
        %v870 = vshrl.u32 %v869, 7
        %v871 = vsub.s32 1, %v870
        %v872 = vrot.slane %v863, %v871
        %v873 = vlaneseq
        %v874 = vshrl.u32 %v873, 7
        %v875 = vsub.s32 2, %v874
        %v876 = vrot.slane %v863, %v875
        %v877 = vlaneseq
        %v878 = vshrl.u32 %v877, 7
        %v879 = vsub.s32 3, %v878
        %v880 = vrot.slane %v863, %v879
        %v881 = vlaneseq
        %v882 = vshrl.u32 %v881, 7
        %v883 = vsub.s32 4, %v882
        %v884 = vrot.slane %v863, %v883
        %v885 = vlaneseq
        %v886 = vshrl.u32 %v885, 7
        %v887 = vsub.s32 5, %v886
        %v888 = vrot.slane %v863, %v887
        %v889 = vlaneseq
        %v890 = vshrl.u32 %v889, 7
        %v891 = vsub.s32 6, %v890
        %v892 = vrot.slane %v863, %v891
        %v912 = vunpack.c.l.b16 %v851
        %v913 = vunpack.c.h.b16 %v851
        %v914 = vunpack.c.l.b16 %v852
        %v915 = vunpack.c.h.b16 %v852
        %v916 = vunpack.c.l.b16 %v853
        %v917 = vunpack.c.h.b16 %v853
        %v918 = vunpack.c.l.b16 %v854
        %v919 = vunpack.c.l.b16 %v855
        %v920 = vunpack.c.h.b16 %v855
        %v921 = vunpack.c.l.b16 %v856
        %v922 = vunpack.c.h.b16 %v856
        %v923 = vunpack.c.l.b16 %v857
        %v924 = vunpack.c.h.b16 %v857
        %v925 = vunpack.c.l.b16 %v858
        %v926 = vunpack.c.l.b16 %v859
        %v927 = vunpack.c.h.b16 %v859
        %v928 = vunpack.c.l.b16 %v860
        %v929 = vunpack.c.h.b16 %v860
        %v930 = vunpack.c.l.b16 %v861
        %v931 = vunpack.c.h.b16 %v861
        %v932 = vunpack.c.l.b16 %v862
        %v933 = vpack.c.b16 %v919, %v912
        %v934 = vpack.c.b16 %v920, %v913
        %v935 = vpack.c.b16 %v921, %v914
        %v936 = vpack.c.b16 %v922, %v915
        %v937 = vpack.c.b16 %v923, %v916
        %v938 = vpack.c.b16 %v924, %v917
        %v939 = vpack.c.b16 %v925, %v918
        %v940 = vpack.c.b16 %v926, %v926
        %v941 = vpack.c.b16 %v927, %v927
        %v942 = vpack.c.b16 %v928, %v928
        %v943 = vpack.c.b16 %v929, %v929
        %v944 = vpack.c.b16 %v930, %v930
        %v945 = vpack.c.b16 %v931, %v931
        %v946 = vpack.c.b16 %v932, %v932
        %vm954 = vcmask 162816
        %v956 = vsel %vm954, %v850, 0
        %vm958 = vcmask 1041408
        %v960 = vsel %vm958, %v940, 0
        %v963 = vsel %vm958, %v941, 0
        %v966 = vsel %vm958, %v942, 0
        %v969 = vsel %vm958, %v943, 0
        %v972 = vsel %vm958, %v944, 0
        %v975 = vsel %vm958, %v945, 0
        %v978 = vsel %vm958, %v946, 0
        %980 = vmatprep.subr.bf16.mxu0 %v934
        %981 = vmatpush1.bf16.msra.mxu0 %v933
        %982 = vmatprep.subr.bf16.mxu0 %v963
        %983 = vmatpush1.bf16.msra.mxu0 %v960
        %984 = vmatprep.subr.bf16.mxu0 0
        %985 = vmatpush1.bf16.msra.mxu0 0
        %986 = vmatprep.subr.bf16.mxu0 0
        %987 = vmatpush1.bf16.msra.mxu0 0
        %988 = vmatprep.subr.bf16.mxu0 0
        %989 = vmatpush1.bf16.msra.mxu0 0
        %990 = vmatprep.subr.bf16.mxu0 0
        %991 = vmatpush1.bf16.msra.mxu0 0
        %992 = vmatprep.subr.bf16.mxu0 0
        %993 = vmatpush1.bf16.msra.mxu0 0
        %994 = vmatprep.subr.bf16.mxu0 0
        %995 = vmatpush1.bf16.msra.mxu0 0
        %996 = vmatprep.subr.bf16.mxu0 0
        %997 = vmatpush1.bf16.msra.mxu0 0
        %998 = vmatprep.subr.bf16.mxu0 0
        %999 = vmatpush1.bf16.msra.mxu0 0
        %1000 = vmatprep.subr.bf16.mxu0 0
        %1001 = vmatpush1.bf16.msra.mxu0 0
        %1002 = vmatprep.subr.bf16.mxu0 0
        %1003 = vmatpush1.bf16.msra.mxu0 0
        %1004 = vmatprep.subr.bf16.mxu0 0
        %1005 = vmatpush1.bf16.msra.mxu0 0
        %1006 = vmatprep.subr.bf16.mxu0 0
        %1007 = vmatpush1.bf16.msra.mxu0 0
        %1008 = vmatprep.subr.bf16.mxu0 0
        %1009 = vmatpush1.bf16.msra.mxu0 0
        %1010 = vmatprep.subr.bf16.mxu0 0
        %1011 = vmatpush1.bf16.msra.mxu0 0
        %1012 = vmatprep.mubr.bf16.mxu0 0
        %1013 = vmatmul.mubr.bf16.gmra.mrb[0].mxu0 %v956
        %v1014 = vpop.f32.mrb[0].mxu0
        %v1015 = vadd.f32 %v868, %v1014
        %v1016 = vpop.f32.mrb[0].mxu0
        %v1017 = vadd.f32 %v872, %v1016
        %v1018 = vpop.f32.mrb[0].mxu0
        %v1019 = vadd.f32 %v868, %v1018
        %v1020 = vpop.f32.mrb[0].mxu0
        %v1021 = vadd.f32 %v872, %v1020
        %1022 = vdwg.mxu0
        %1023 = vmatprep.subr.bf16.mxu0 %v936
        %1024 = vmatpush1.bf16.msra.mxu0 %v935
        %1025 = vmatprep.subr.bf16.mxu0 %v969
        %1026 = vmatpush1.bf16.msra.mxu0 %v966
        %1027 = vmatprep.subr.bf16.mxu0 0
        %1028 = vmatpush1.bf16.msra.mxu0 0
        %1029 = vmatprep.subr.bf16.mxu0 0
        %1030 = vmatpush1.bf16.msra.mxu0 0
        %1031 = vmatprep.subr.bf16.mxu0 0
        %1032 = vmatpush1.bf16.msra.mxu0 0
        %1033 = vmatprep.subr.bf16.mxu0 0
        %1034 = vmatpush1.bf16.msra.mxu0 0
        %1035 = vmatprep.subr.bf16.mxu0 0
        %1036 = vmatpush1.bf16.msra.mxu0 0
        %1037 = vmatprep.subr.bf16.mxu0 0
        %1038 = vmatpush1.bf16.msra.mxu0 0
        %1039 = vmatprep.subr.bf16.mxu0 0
        %1040 = vmatpush1.bf16.msra.mxu0 0
        %1041 = vmatprep.subr.bf16.mxu0 0
        %1042 = vmatpush1.bf16.msra.mxu0 0
        %1043 = vmatprep.subr.bf16.mxu0 0
        %1044 = vmatpush1.bf16.msra.mxu0 0
        %1045 = vmatprep.subr.bf16.mxu0 0
        %1046 = vmatpush1.bf16.msra.mxu0 0
        %1047 = vmatprep.subr.bf16.mxu0 0
        %1048 = vmatpush1.bf16.msra.mxu0 0
        %1049 = vmatprep.subr.bf16.mxu0 0
        %1050 = vmatpush1.bf16.msra.mxu0 0
        %1051 = vmatprep.subr.bf16.mxu0 0
        %1052 = vmatpush1.bf16.msra.mxu0 0
        %1053 = vmatprep.subr.bf16.mxu0 0
        %1054 = vmatpush1.bf16.msra.mxu0 0
        %1055 = vmatprep.mubr.bf16.mxu0 0
        %1056 = vmatmul.mubr.bf16.gmra.mrb[0].mxu0 %v956
        %v1057 = vpop.f32.mrb[0].mxu0
        %v1058 = vadd.f32 %v876, %v1057
        %v1059 = vpop.f32.mrb[0].mxu0
        %v1060 = vadd.f32 %v880, %v1059
        %v1061 = vpop.f32.mrb[0].mxu0
        %v1062 = vadd.f32 %v876, %v1061
        %v1063 = vpop.f32.mrb[0].mxu0
        %v1064 = vadd.f32 %v880, %v1063
        %1065 = vdwg.mxu0
        %1066 = vmatprep.subr.bf16.mxu0 %v938
        %1067 = vmatpush1.bf16.msra.mxu0 %v937
        %1068 = vmatprep.subr.bf16.mxu0 %v975
        %1069 = vmatpush1.bf16.msra.mxu0 %v972
        %1070 = vmatprep.subr.bf16.mxu0 0
        %1071 = vmatpush1.bf16.msra.mxu0 0
        %1072 = vmatprep.subr.bf16.mxu0 0
        %1073 = vmatpush1.bf16.msra.mxu0 0
        %1074 = vmatprep.subr.bf16.mxu0 0
        %1075 = vmatpush1.bf16.msra.mxu0 0
        %1076 = vmatprep.subr.bf16.mxu0 0
        %1077 = vmatpush1.bf16.msra.mxu0 0
        %1078 = vmatprep.subr.bf16.mxu0 0
        %1079 = vmatpush1.bf16.msra.mxu0 0
        %1080 = vmatprep.subr.bf16.mxu0 0
        %1081 = vmatpush1.bf16.msra.mxu0 0
        %1082 = vmatprep.subr.bf16.mxu0 0
        %1083 = vmatpush1.bf16.msra.mxu0 0
        %1084 = vmatprep.subr.bf16.mxu0 0
        %1085 = vmatpush1.bf16.msra.mxu0 0
        %1086 = vmatprep.subr.bf16.mxu0 0
        %1087 = vmatpush1.bf16.msra.mxu0 0
        %1088 = vmatprep.subr.bf16.mxu0 0
        %1089 = vmatpush1.bf16.msra.mxu0 0
        %1090 = vmatprep.subr.bf16.mxu0 0
        %1091 = vmatpush1.bf16.msra.mxu0 0
        %1092 = vmatprep.subr.bf16.mxu0 0
        %1093 = vmatpush1.bf16.msra.mxu0 0
        %1094 = vmatprep.subr.bf16.mxu0 0
        %1095 = vmatpush1.bf16.msra.mxu0 0
        %1096 = vmatprep.subr.bf16.mxu0 0
        %1097 = vmatpush1.bf16.msra.mxu0 0
        %1098 = vmatprep.mubr.bf16.mxu0 0
        %1099 = vmatmul.mubr.bf16.gmra.mrb[0].mxu0 %v956
        %v1100 = vpop.f32.mrb[0].mxu0
        %v1101 = vadd.f32 %v884, %v1100
        %v1102 = vpop.f32.mrb[0].mxu0
        %v1103 = vadd.f32 %v888, %v1102
        %v1104 = vpop.f32.mrb[0].mxu0
        %v1105 = vadd.f32 %v884, %v1104
        %v1106 = vpop.f32.mrb[0].mxu0
        %v1107 = vadd.f32 %v888, %v1106
        %1108 = vdwg.mxu0
        %1109 = vmatprep.subr.bf16.mxu0 0
        %1110 = vmatpush1.bf16.msra.mxu0 %v939
        %1111 = vmatprep.subr.bf16.mxu0 0
        %1112 = vmatpush1.bf16.msra.mxu0 %v978
        %1113 = vmatprep.subr.bf16.mxu0 0
        %1114 = vmatpush1.bf16.msra.mxu0 0
        %1115 = vmatprep.subr.bf16.mxu0 0
        %1116 = vmatpush1.bf16.msra.mxu0 0
        %1117 = vmatprep.subr.bf16.mxu0 0
        %1118 = vmatpush1.bf16.msra.mxu0 0
        %1119 = vmatprep.subr.bf16.mxu0 0
        %1120 = vmatpush1.bf16.msra.mxu0 0
        %1121 = vmatprep.subr.bf16.mxu0 0
        %1122 = vmatpush1.bf16.msra.mxu0 0
        %1123 = vmatprep.subr.bf16.mxu0 0
        %1124 = vmatpush1.bf16.msra.mxu0 0
        %1125 = vmatprep.subr.bf16.mxu0 0
        %1126 = vmatpush1.bf16.msra.mxu0 0
        %1127 = vmatprep.subr.bf16.mxu0 0
        %1128 = vmatpush1.bf16.msra.mxu0 0
        %1129 = vmatprep.subr.bf16.mxu0 0
        %1130 = vmatpush1.bf16.msra.mxu0 0
        %1131 = vmatprep.subr.bf16.mxu0 0
        %1132 = vmatpush1.bf16.msra.mxu0 0
        %1133 = vmatprep.subr.bf16.mxu0 0
        %1134 = vmatpush1.bf16.msra.mxu0 0
        %1135 = vmatprep.subr.bf16.mxu0 0
        %1136 = vmatpush1.bf16.msra.mxu0 0
        %1137 = vmatprep.subr.bf16.mxu0 0
        %1138 = vmatpush1.bf16.msra.mxu0 0
        %1139 = vmatprep.subr.bf16.mxu0 0
        %1140 = vmatpush1.bf16.msra.mxu0 0
        %1141 = vmatprep.mubr.bf16.mxu0 0
        %1142 = vmatmul.mubr.bf16.gmra.mrb[0].mxu0 %v956
        %v1143 = vpop.f32.mrb[0].mxu0
        %v1144 = vadd.f32 %v892, %v1143
        %v1145 = vpop.f32.mrb[0].mxu0
        %v1146 = vpop.f32.mrb[0].mxu0
        %v1147 = vadd.f32 %v892, %v1146
        %v1148 = vpop.f32.mrb[0].mxu0
        %1149 = vdwg.mxu0
        %v1150 = vmul.f32 %v1015, 0.5
        %v1151 = vmul.f32 %v1017, 0.5
        %v1152 = vmul.f32 %v1058, 0.5
        %v1153 = vmul.f32 %v1060, 0.5
        %v1154 = vmul.f32 %v1101, 0.5
        %v1155 = vmul.f32 %v1103, 0.5
        %v1156 = vmul.f32 %v1144, 0.5
        %v1157 = vmul.f32 %v1019, 0.5
        %v1158 = vmul.f32 %v1021, 0.5
        %v1159 = vmul.f32 %v1062, 0.5
        %v1160 = vmul.f32 %v1064, 0.5
        %v1161 = vmul.f32 %v1105, 0.5
        %v1162 = vmul.f32 %v1107, 0.5
        %v1163 = vmul.f32 %v1147, 0.5
        %v1164 = vtanh.pop %v1150
        %v1165 = vtanh.pop %v1151
        %v1166 = vtanh.pop %v1152
        %v1167 = vtanh.pop %v1153
        %v1168 = vtanh.pop %v1154
        %v1169 = vtanh.pop %v1155
        %v1170 = vtanh.pop %v1156
        %v1171 = vtanh.pop %v1157
        %v1172 = vtanh.pop %v1158
        %v1173 = vtanh.pop %v1159
        %v1174 = vtanh.pop %v1160
        %v1175 = vtanh.pop %v1161
        %v1176 = vtanh.pop %v1162
        %v1177 = vtanh.pop %v1163
        %v1178 = vmul.f32 %v1164, 0.5
        %v1179 = vmul.f32 %v1165, 0.5
        %v1180 = vmul.f32 %v1166, 0.5
        %v1181 = vmul.f32 %v1167, 0.5
        %v1182 = vmul.f32 %v1168, 0.5
        %v1183 = vmul.f32 %v1169, 0.5
        %v1184 = vmul.f32 %v1170, 0.5
        %v1185 = vmul.f32 %v1171, 0.5
        %v1186 = vmul.f32 %v1172, 0.5
        %v1187 = vmul.f32 %v1173, 0.5
        %v1188 = vmul.f32 %v1174, 0.5
        %v1189 = vmul.f32 %v1175, 0.5
        %v1190 = vmul.f32 %v1176, 0.5
        %v1191 = vmul.f32 %v1177, 0.5
        %v1192 = vadd.f32 %v1178, 0.5
        %v1193 = vadd.f32 %v1179, 0.5
        %v1194 = vadd.f32 %v1180, 0.5
        %v1195 = vadd.f32 %v1181, 0.5
        %v1196 = vadd.f32 %v1182, 0.5
        %v1197 = vadd.f32 %v1183, 0.5
        %v1198 = vadd.f32 %v1184, 0.5
        %v1199 = vadd.f32 %v1185, 0.5
        %v1200 = vadd.f32 %v1186, 0.5
        %v1201 = vadd.f32 %v1187, 0.5
        %v1202 = vadd.f32 %v1188, 0.5
        %v1203 = vadd.f32 %v1189, 0.5
        %v1204 = vadd.f32 %v1190, 0.5
        %v1205 = vadd.f32 %v1191, 0.5
        %1206 = vst [vmem:[%s235] sm:$0xff] %v1192
        %1207 = vst [vmem:[%s235 + $0x8] sm:$0xff] %v1193
        %1208 = vst [vmem:[%s235 + $0x10] sm:$0xff] %v1194
        %1209 = vst [vmem:[%s235 + $0x18] sm:$0xff] %v1195
        %1210 = vst [vmem:[%s235 + $0x20] sm:$0xff] %v1196
        %1211 = vst [vmem:[%s235 + $0x28] sm:$0xff] %v1197
        %1212 = vst.msk [vmem:[%s235 + $0x30] sm:$0xff] %vm680, %v1198
        %1213 = vst [vmem:[%s235 + $0x38] sm:$0xff] %v1199
        %1214 = vst [vmem:[%s235 + $0x40] sm:$0xff] %v1200
        %1215 = vst [vmem:[%s235 + $0x48] sm:$0xff] %v1201
        %1216 = vst [vmem:[%s235 + $0x50] sm:$0xff] %v1202
        %1217 = vst [vmem:[%s235 + $0x58] sm:$0xff] %v1203
        %1218 = vst [vmem:[%s235 + $0x60] sm:$0xff] %v1204
        %1219 = vst.msk [vmem:[%s235 + $0x68] sm:$0xff] %vm680, %v1205
        %s1220 = sand.u32 %s137, 1
        %s1221 = scalar_lea.sflag [#allocation3], %s1220
        %s1222 = sand.u32 %s137, 1
        %s1223 = smul.addr %s1222, 112
        %s1224 = scalar_lea.vmem [#allocation2], %s1223
        // Predicated region
        $region41: #{autoencoder_forward.1} parent=39 // pred_check
          %p1225 = pneg %p147
        $region42: #{autoencoder_forward.1} parent=39 // pred_check_branch
          %1227 = sbr.rel (%p1225) target = $region44
        $region43: #{autoencoder_forward.1} parent=39 // pred_region
          %s1228 = smul.u32 2, %s19
          %s1229 = ssub.s32 3, %s1228
          %p1230 = scmp.lt.s32.totalorder %s1229, 2
          %s1231 = scalar_select %p1230, %s1229, 2
          %s1232 = smul.u32 128, %s1231
          %s1233 = smul.u32 %s1232, 7
          %s1235 = ssub.s32 1792, %s1233
          %1236 = vsyncadd %s1221, %s1235
          %p1237 = scmp.ne.s32.totalorder 0, %s1233
          %s1238 = smul.addr %s1228, 7
          %s1239 = smul.addr %s1238, 128
          %s1240 = scalar_lea.hbm %s5, %s1239
          %s1241 = smul.u32 56, %s1231
          %s1242 = sshll.u32 %s1224, 4
          %s1243 = int_to_ptr.vmem [resolvable:$true] %s1242
          %s1244 = sshll.u32 %s1241, 4
          %1248 = dma.vmem_to_hbm [thread:$0]  (%p1237), %s1243, %s1244, %s1240, %s1221, 896, 896, 56
        $region44: #{autoencoder_forward.1} parent=39 // pred_fallthru
          _
      $region40: #{autoencoder_forward.1} parent=5 // pred_fallthru
        _
      %p1249 = scmp.le.s32.totalorder 2, %s14
      // Predicated region
      $region45: #{autoencoder_forward.1} parent=5 // pred_check
        %p1250 = pneg %p1249
      $region46: #{autoencoder_forward.1} parent=5 // pred_check_branch
        %1252 = sbr.rel (%p1250) target = $region48
      $region47: #{autoencoder_forward.1} parent=5 // pred_region
        %s1253 = ssub.s32 %s14, 2
        // Predicated region
        $region49: #{autoencoder_forward.1} parent=47 // pred_check
          %p1254 = pneg %p153
        $region50: #{autoencoder_forward.1} parent=47 // pred_check_branch
          %1256 = sbr.rel (%p1254) target = $region52
        $region51: #{autoencoder_forward.1} parent=47 // pred_region
          %s1257 = sand.u32 %s138, 1
          %s1258 = scalar_lea.sflag [#allocation3], %s1257
          %s1259 = sand.u32 %s138, 1
          %s1260 = smul.addr %s1259, 112
          %s1261 = scalar_lea.vmem [#allocation2], %s1260
          %1262 = dma.done %s1258, 1792
        $region52: #{autoencoder_forward.1} parent=47 // pred_fallthru
          _
      $region48: #{autoencoder_forward.1} parent=5 // pred_fallthru
        _
    $region6: #{autoencoder_forward.1} parent=1 // loop_footer
      %s18 = sadd.s32 1, %s14
    $region7: #{autoencoder_forward.1} parent=1 // loop_footer_branch
      %13 = sbr.rel target = $region3
    $region8: #{autoencoder_forward.1} parent=1 // loop_exit
      _
    %1263 = vsyncpa [#allocation3], 1
    %s1264 = scalar_lea.sflag [#allocation3], 1
    %1265 = vsyncpa %s1264, 1

</llo_original>
